<compile_context>
chip_gen: v7x
topology: tpu7x:2x2x1
jax: 0.10.0
libtpu: 0.0.40
codegen_flags: <defaults>
</compile_context>

<pallas_src>
import jax
import jax.numpy as jnp
from jax import lax
from jax.experimental import pallas as pl
from jax.experimental.pallas import tpu as pltpu


def _cpad(c):
    """Round a channel count up to a multiple of the 128-lane vreg width."""
    return ((c + 127) // 128) * 128


def _default_plan():
    """(prefer_even_grid, target_rows) heuristic from the attached TPU generation."""
    try:
        kind = jax.devices()[0].device_kind.lower()
    except Exception:
        kind = ""
    multicore = ("v7" in kind) or ("7x" in kind)      # v7x: 2 TensorCores / chip
    target_rows = 2048 if multicore else 8192         # single-TC: fewer, larger steps
    return multicore, target_rows


def _choose_point_tile(A, Pp, target_rows):
    """Largest point tile tp (tp | Pp, tp % 8 == 0) with A*tp rows within budget."""
    best = 8
    for tp in range(8, Pp + 1, 8):
        if Pp % tp == 0 and A * tp <= target_rows:
            best = tp
    return min(best, Pp)


def _choose_tile_b(B, rows_per_batch_step, target_rows, prefer_even_grid):
    """Largest divisor of B fitting the row budget; on v7x prefer an even step count."""
    divs = [d for d in range(1, B + 1) if B % d == 0]
    fit = [d for d in divs if d * rows_per_batch_step <= target_rows]
    if not fit:
        return 1
    if prefer_even_grid:
        even = [d for d in fit if (B // d) % 2 == 0]
        if even:
            return max(even)
    return max(fit)


def _make_inv_out_kernel(num_layers, tile_b, A, tp, c_outs_pad):
    """One grid step = `tile_b` batches x all anchors x `tp` points."""
    c_last_pad = c_outs_pad[-1]
    inv_A = 1.0 / A
    rows = tile_b * A * tp

    def kernel(*refs):
        # refs = (x, W_0..W_{n-1}, shifts, out, acc_scratch)
        x_ref = refs[0]
        w_refs = refs[1:1 + num_layers]
        shifts_ref = refs[1 + num_layers]
        out_ref = refs[2 + num_layers]
        acc_ref = refs[3 + num_layers]

        pt = pl.program_id(1)
        n_pt = pl.num_programs(1)

        @pl.when(pt == 0)
        def _():
            # Padded channels always pool to 0 (zero weights/shifts), so -inf never leaks.
            acc_ref[...] = jnp.full_like(acc_ref, -jnp.inf)

        pvec = shifts_ref[...]                               # (n_layers+2, C_max_pad) f32

        x = x_ref[...]                                       # (tile_b, A, tp, Cin)
        h = x.reshape(rows, x.shape[-1])                     # free: tp % 8 == 0
        for lid in range(num_layers):
            w = w_refs[lid][...]                             # (c_prev[_pad], c_out_pad)
            c_out_pad = c_outs_pad[lid]
            shift = pvec[lid:lid + 1, :c_out_pad]            # (1, c_out_pad) f32
            # MXU matmul, f32 accumulation; eval-mode BatchNorm2d folded into w/shift.
            h = jnp.dot(h.astype(w.dtype), w,
                        preferred_element_type=jnp.float32) + shift
            if lid != num_layers - 1:
                h = jnp.maximum(h, 0.0)                      # ReLU

        # ---- vectorized pooling epilogue (all f32) ----
        h4 = h.reshape(tile_b, A, tp, c_last_pad)            # free: tp%8==0, C%128==0
        mean_a = jnp.sum(h4, axis=1) * inv_A                 # mean over anchors (tile_b, tp, C)
        pooled = jnp.max(mean_a, axis=1)                     # max over this point tile (tile_b, C)
        acc_ref[...] = jnp.maximum(acc_ref[...], pooled)     # running max over point tiles

        @pl.when(pt == n_pt - 1)
        def _():
            out_scale = pvec[num_layers:num_layers + 1, :c_last_pad]
            out_shift = pvec[num_layers + 1:num_layers + 2, :c_last_pad]
            z = acc_ref[...] * out_scale + out_shift          # folded BatchNorm1d (eval)
            ssum = jnp.sum(z * z, axis=-1, keepdims=True)
            # F.normalize(p=2): z / max(||z||, 1e-12) == z * rsqrt(max(ssum, 1e-24)) (EUP)
            z = z * lax.rsqrt(jnp.maximum(ssum, 1e-24))
            out_ref[...] = z.astype(out_ref.dtype)            # single lane-dense store

    return kernel


def inv_out_block_pallas(feats, weights, biases, bn_params, out_bn, *,
                         eps=1e-5, matmul_dtype=jnp.bfloat16,
                         target_rows=None, prefer_even_grid=None):
    """feats: (B, C_in, A, P) float32 (PyTorch NCHW layout).

    Returns (inv_feat (B, C_last) L2-normalized, sphere (B, C_in, P)).
    """
    B, Cin, A, P = feats.shape
    n = len(weights)

    if prefer_even_grid is None or target_rows is None:
        mc, tr = _default_plan()
        if prefer_even_grid is None:
            prefer_even_grid = mc
        if target_rows is None:
            target_rows = tr

    # sphere = feats.mean(dim=2) — plain mem-bound reduction, leave to XLA.
    sphere = feats.mean(axis=2)                              # (B, C_in, P)

    # ---- layout prep: channels-last + operand-dtype cast in ONE copy; Cin stays unpadded ----
    Pp = ((P + 7) // 8) * 8
    x = jnp.transpose(feats, (0, 2, 3, 1)).astype(matmul_dtype)   # (B, A, P, Cin)
    if Pp != P:
        # replicate the last point: per-point anchor-mean unchanged, duplicates
        # never change the max over points (valid for 'max' pooling only).
        pad = jnp.broadcast_to(x[:, :, P - 1:P, :], (B, A, Pp - P, Cin))
        x = jnp.concatenate([x, pad], axis=2)

    tp = _choose_point_tile(A, Pp, target_rows)
    tile_b = _choose_tile_b(B, A * tp, target_rows, prefer_even_grid)
    grid_b = B // tile_b
    n_pt = Pp // tp

    # ---- fold BN into weights/shifts; pad weight channels to lane multiples ----
    w_args, w_specs, c_outs_pad, shift_rows = [], [], [], []
    c_prev, c_prev_pad = Cin, Cin                            # first-layer K stays unpadded
    for lid in range(n):
        W = jnp.asarray(weights[lid], jnp.float32)           # (c_out, c_prev) torch-style
        b = jnp.asarray(biases[lid], jnp.float32)
        c_out = W.shape[0]
        c_out_pad = _cpad(c_out)
        Wt = W.T                                             # (c_prev, c_out)
        if lid != n - 1:
            g_, bt_, m_, v_ = bn_params[lid]
            scale = g_ / jnp.sqrt(v_ + eps)
            shift = b * scale + (bt_ - m_ * scale)
            Wt = Wt * scale[None, :]
        else:
            shift = b
        Wp = jnp.zeros((c_prev_pad, c_out_pad), jnp.float32).at[:c_prev, :c_out].set(Wt)
        w_args.append(Wp.astype(matmul_dtype))
        w_specs.append(pl.BlockSpec((c_prev_pad, c_out_pad), lambda g, p: (0, 0)))
        shift_rows.append((shift, c_out))
        c_outs_pad.append(c_out_pad)
        c_prev, c_prev_pad = c_out, c_out_pad

    c_last, c_last_pad = c_prev, c_prev_pad

    # ---- all small per-channel vectors in ONE (n+2, C_max_pad) f32 input ----
    C_max_pad = max(c_outs_pad)
    n_rows = n + 2
    shifts = jnp.zeros((n_rows, C_max_pad), jnp.float32)
    for lid, (shift, c_out) in enumerate(shift_rows):
        shifts = shifts.at[lid, :c_out].set(shift)
    g_, bt_, m_, v_ = out_bn                                 # folded out_norm (eval)
    scale_o = g_ / jnp.sqrt(v_ + eps)
    shift_o = bt_ - m_ * scale_o
    shifts = shifts.at[n, :c_last].set(scale_o)
    shifts = shifts.at[n + 1, :c_last].set(shift_o)

    in_specs = ([pl.BlockSpec((tile_b, A, tp, Cin), lambda g, p: (g, 0, p, 0))]
                + w_specs
                + [pl.BlockSpec((n_rows, C_max_pad), lambda g, p: (0, 0))])
    out_spec = pl.BlockSpec((None, tile_b, c_last_pad), lambda g, p: (g, 0, 0))

    # ---- explicit VMEM budget from block sizes ----
    op_isz = jnp.dtype(matmul_dtype).itemsize
    x_blk = tile_b * A * tp * Cin * op_isz
    w_blk = sum(int(w.size) for w in w_args) * op_isz
    sh_blk = n_rows * C_max_pad * 4
    out_blk = tile_b * c_last_pad * 4
    acc_blk = tile_b * c_last_pad * 4
    live_h = 2 * tile_b * A * tp * C_max_pad * 4             # f32 h + one temp
    vmem_limit = 2 * (x_blk + w_blk + sh_blk + out_blk) + acc_blk + live_h + (8 << 20)
    try:
        phys = int(pltpu.get_tpu_info().vmem_capacity_bytes)
    except Exception:
        phys = 64 << 20
    vmem_limit = int(max(min(vmem_limit, int(phys * 0.9)), 16 << 20))

    out3 = pl.pallas_call(
        _make_inv_out_kernel(n, tile_b, A, tp, tuple(c_outs_pad)),
        out_shape=jax.ShapeDtypeStruct((grid_b, tile_b, c_last_pad), jnp.float32),
        grid_spec=pltpu.PrefetchScalarGridSpec(
            num_scalar_prefetch=0,
            grid=(grid_b, n_pt),
            in_specs=in_specs,
            out_specs=out_spec,
            scratch_shapes=[pltpu.VMEM((tile_b, c_last_pad), jnp.float32)],
        ),
        compiler_params=pltpu.CompilerParams(
            dimension_semantics=("parallel", "arbitrary"),
            vmem_limit_bytes=vmem_limit),
    )(x, *w_args, shifts)

    inv_feat = out3.reshape(B, c_last_pad)[:, :c_last]       # strip channel padding
    return inv_feat, sphere


def inv_out_block_reference(feats, weights, biases, bn_params, out_bn, eps=1e-5):
    """Pure-JAX reference mirroring the PyTorch forward (eval-mode BN, 'max' pooling)."""
    sphere = feats.mean(axis=2)                              # (B, C_in, P)
    x = feats
    n = len(weights)
    for lid in range(n):
        W, b = weights[lid], biases[lid]
        x = jnp.einsum("oc,bcap->boap", W, x) + b[None, :, None, None]
        if lid != n - 1:
            g, bt, m, v = bn_params[lid]
            x = (x - m[None, :, None, None]) / jnp.sqrt(v[None, :, None, None] + eps)
            x = x * g[None, :, None, None] + bt[None, :, None, None]
            x = jnp.maximum(x, 0.0)
    pooled = x.mean(axis=2).max(axis=-1)                     # (B, C_last)
    g, bt, m, v = out_bn
    y = (pooled - m) / jnp.sqrt(v + eps) * g + bt
    norm = jnp.maximum(jnp.sqrt(jnp.sum(y * y, axis=1, keepdims=True)), 1e-12)
    return y / norm, sphere


if __name__ == "__main__":
    key = jax.random.PRNGKey(0)
    B, Cin, A, P = 2, 4, 8, 16        # batch, dim_in, anchors, points
    mlp = [8, 16]                     # params['mlp']

    keys = iter(jax.random.split(key, 32))

    feats = jax.random.normal(next(keys), (B, Cin, A, P), dtype=jnp.float32)

    weights, biases, bn_params = [], [], []
    c_in = Cin
    for c in mlp:
        weights.append(jax.random.normal(next(keys), (c, c_in), dtype=jnp.float32) * 0.2)
        biases.append(jax.random.normal(next(keys), (c,), dtype=jnp.float32) * 0.1)
        gamma = jax.random.uniform(next(keys), (c,), minval=0.5, maxval=1.5, dtype=jnp.float32)
        beta = jax.random.normal(next(keys), (c,), dtype=jnp.float32) * 0.1
        mean = jax.random.normal(next(keys), (c,), dtype=jnp.float32) * 0.1
        var = jax.random.uniform(next(keys), (c,), minval=0.5, maxval=1.5, dtype=jnp.float32)
        bn_params.append((gamma, beta, mean, var))
        c_in = c

    out_bn = (
        jax.random.uniform(next(keys), (c_in,), minval=0.5, maxval=1.5, dtype=jnp.float32),
        jax.random.normal(next(keys), (c_in,), dtype=jnp.float32) * 0.1,
        jax.random.normal(next(keys), (c_in,), dtype=jnp.float32) * 0.1,
        jax.random.uniform(next(keys), (c_in,), minval=0.5, maxval=1.5, dtype=jnp.float32),
    )

    ref_inv, ref_sphere = inv_out_block_reference(feats, weights, biases, bn_params, out_bn)

    # Default path (bf16 matmul operands, f32 accumulation/epilogue): loose tolerance.
    inv_bf16, sphere_bf16 = inv_out_block_pallas(feats, weights, biases, bn_params, out_bn)
    jax.block_until_ready((inv_bf16, sphere_bf16))
    assert inv_bf16.shape == (B, mlp[-1])
    assert sphere_bf16.shape == (B, Cin, P)
    assert jnp.allclose(inv_bf16, ref_inv, rtol=0.0, atol=5e-2)
    assert jnp.allclose(sphere_bf16, ref_sphere, rtol=1e-4, atol=1e-5)

    # Full-f32 path: tight tolerance.
    inv_f32, sphere_f32 = inv_out_block_pallas(
        feats, weights, biases, bn_params, out_bn, matmul_dtype=jnp.float32)
    jax.block_until_ready((inv_f32, sphere_f32))
    assert jnp.allclose(inv_f32, ref_inv, rtol=1e-4, atol=5e-5)
    assert jnp.allclose(sphere_f32, ref_sphere, rtol=1e-4, atol=1e-5)

    # Force the multi-step path (points-tiling 'arbitrary' axis + even batch grid),
    # exercising the running-max accumulator and the megacore-style plan.
    inv_tiled, sphere_tiled = inv_out_block_pallas(
        feats, weights, biases, bn_params, out_bn, matmul_dtype=jnp.float32,
        target_rows=64, prefer_even_grid=True)
    jax.block_until_ready((inv_tiled, sphere_tiled))
    assert jnp.allclose(inv_tiled, ref_inv, rtol=1e-4, atol=5e-5)
    assert jnp.allclose(sphere_tiled, ref_sphere, rtol=1e-4, atol=1e-5)

    print("KERNEL_OK")
</pallas_src>

<mosaic_0001>
module attributes {stable_mosaic.version = 11 : i64} {
  func.func @kernel(%arg0: i32, %arg1: i32, %arg2: memref<2x8x16x4xbf16, #tpu.memory_space<vmem>>, %arg3: memref<4x128xbf16, #tpu.memory_space<vmem>>, %arg4: memref<128x128xbf16, #tpu.memory_space<vmem>>, %arg5: memref<4x128xf32, #tpu.memory_space<vmem>>, %arg6: memref<1x2x128xf32, #tpu.memory_space<vmem>>, %arg7: memref<2x128xf32, #tpu.memory_space<vmem>>) attributes {dimension_semantics = [#tpu.dimension_semantics<parallel>, #tpu.dimension_semantics<arbitrary>], iteration_bounds = array<i64: 1, 1>, scalar_prefetch = 0 : i64, scratch_operands = 1 : i64, tpu.core_type = #tpu.core_type<tc>, window_params = [{transform_indices = @transform_0, window_bounds = array<i64: 2, 8, 16, 4>}, {pipeline_mode = #tpu.pipeline_mode<synchronous>, transform_indices = @transform_1, window_bounds = array<i64: 4, 128>}, {pipeline_mode = #tpu.pipeline_mode<synchronous>, transform_indices = @transform_2, window_bounds = array<i64: 128, 128>}, {pipeline_mode = #tpu.pipeline_mode<synchronous>, transform_indices = @transform_3, window_bounds = array<i64: 4, 128>}, {transform_indices = @transform_4, window_bounds = array<i64: 1, 2, 128>}]} {
    %c0_i32 = arith.constant 0 : i32
    %0 = arith.cmpi eq, %arg1, %c0_i32 : i32
    %1 = arith.extui %0 : i1 to i32
    %c0_i32_0 = arith.constant 0 : i32
    %2 = arith.cmpi ne, %1, %c0_i32_0 : i32
    scf.if %2 {
      %cst_21 = arith.constant 0xFF800000 : f32
      %30 = vector.broadcast %cst_21 : f32 to vector<2x128xf32>
      %c0_22 = arith.constant 0 : index
      %c0_23 = arith.constant 0 : index
      %31 = vector.load %arg7[%c0_22, %c0_23] : memref<2x128xf32, #tpu.memory_space<vmem>>, vector<2x128xf32>
      tpu.vector_store %arg7[%c0_22, %c0_23], %30 {strides = array<i32>} : memref<2x128xf32, #tpu.memory_space<vmem>>, vector<2x128xf32>,
    } else {
    }
    %c0 = arith.constant 0 : index
    %c0_1 = arith.constant 0 : index
    %3 = vector.load %arg5[%c0, %c0_1] : memref<4x128xf32, #tpu.memory_space<vmem>>, vector<4x128xf32>
    %c0_2 = arith.constant 0 : index
    %c0_3 = arith.constant 0 : index
    %c0_4 = arith.constant 0 : index
    %c0_5 = arith.constant 0 : index
    %4 = vector.load %arg2[%c0_2, %c0_3, %c0_4, %c0_5] : memref<2x8x16x4xbf16, #tpu.memory_space<vmem>>, vector<2x8x16x4xbf16>
    %5 = vector.shape_cast %4 : vector<2x8x16x4xbf16> to vector<256x4xbf16>
    %c0_6 = arith.constant 0 : index
    %c0_7 = arith.constant 0 : index
    %6 = vector.load %arg3[%c0_6, %c0_7] : memref<4x128xbf16, #tpu.memory_space<vmem>>, vector<4x128xbf16>
    %7 = vector.extract_strided_slice %3 {offsets = [0, 0], sizes = [1, 128], strides = [1, 1]} : vector<4x128xf32> to vector<1x128xf32>
    %cst = arith.constant dense<0.000000e+00> : vector<256x128xf32>
    %8 = tpu.matmul %5, %6, %cst {dimension_numbers = #tpu.dot_dimension_numbers<[1], [0], [0], [1], [0, 0, 1, 1], [], []>} : vector<256x4xbf16>, vector<4x128xbf16>, vector<256x128xf32> -> vector<256x128xf32>
    %9 = vector.broadcast %7 : vector<1x128xf32> to vector<256x128xf32>
    %10 = arith.addf %8, %9 : vector<256x128xf32>
    %cst_8 = arith.constant 0.000000e+00 : f32
    %11 = vector.broadcast %cst_8 : f32 to vector<256x128xf32>
    %12 = arith.maximumf %10, %11 : vector<256x128xf32>
    %c0_9 = arith.constant 0 : index
    %c0_10 = arith.constant 0 : index
    %13 = vector.load %arg4[%c0_9, %c0_10] : memref<128x128xbf16, #tpu.memory_space<vmem>>, vector<128x128xbf16>
    %14 = vector.extract_strided_slice %3 {offsets = [1, 0], sizes = [1, 128], strides = [1, 1]} : vector<4x128xf32> to vector<1x128xf32>
    %15 = arith.truncf %12 : vector<256x128xf32> to vector<256x128xbf16>
    %cst_11 = arith.constant dense<0.000000e+00> : vector<256x128xf32>
    %16 = tpu.matmul %15, %13, %cst_11 {dimension_numbers = #tpu.dot_dimension_numbers<[1], [0], [0], [1], [0, 0, 1, 1], [], []>} : vector<256x128xbf16>, vector<128x128xbf16>, vector<256x128xf32> -> vector<256x128xf32>
    %17 = vector.broadcast %14 : vector<1x128xf32> to vector<256x128xf32>
    %18 = arith.addf %16, %17 : vector<256x128xf32>
    %19 = vector.shape_cast %18 : vector<256x128xf32> to vector<2x8x16x128xf32>
    %cst_12 = arith.constant dense<0.000000e+00> : vector<2x16x128xf32>
    %20 = vector.multi_reduction <add>, %19, %cst_12 [1] : vector<2x8x16x128xf32> to vector<2x16x128xf32>
    %cst_13 = arith.constant 1.250000e-01 : f32
    %21 = vector.broadcast %cst_13 : f32 to vector<2x16x128xf32>
    %22 = arith.mulf %20, %21 : vector<2x16x128xf32>
    %cst_14 = arith.constant dense<0xFF800000> : vector<2x128xf32>
    %23 = vector.multi_reduction <maximumf>, %22, %cst_14 [1] : vector<2x16x128xf32> to vector<2x128xf32>
    %c0_15 = arith.constant 0 : index
    %c0_16 = arith.constant 0 : index
    %24 = vector.load %arg7[%c0_15, %c0_16] : memref<2x128xf32, #tpu.memory_space<vmem>>, vector<2x128xf32>
    %25 = arith.maximumf %24, %23 : vector<2x128xf32>
    %c0_17 = arith.constant 0 : index
    %c0_18 = arith.constant 0 : index
    %26 = vector.load %arg7[%c0_17, %c0_18] : memref<2x128xf32, #tpu.memory_space<vmem>>, vector<2x128xf32>
    tpu.vector_store %arg7[%c0_17, %c0_18], %25 {strides = array<i32>} : memref<2x128xf32, #tpu.memory_space<vmem>>, vector<2x128xf32>,
    %c0_i32_19 = arith.constant 0 : i32
    %27 = arith.cmpi eq, %arg1, %c0_i32_19 : i32
    %28 = arith.extui %27 : i1 to i32
    %c0_i32_20 = arith.constant 0 : i32
    %29 = arith.cmpi ne, %28, %c0_i32_20 : i32
    scf.if %29 {
      %30 = vector.extract_strided_slice %3 {offsets = [2, 0], sizes = [1, 128], strides = [1, 1]} : vector<4x128xf32> to vector<1x128xf32>
      %31 = vector.extract_strided_slice %3 {offsets = [3, 0], sizes = [1, 128], strides = [1, 1]} : vector<4x128xf32> to vector<1x128xf32>
      %c0_21 = arith.constant 0 : index
      %c0_22 = arith.constant 0 : index
      %32 = vector.load %arg7[%c0_21, %c0_22] : memref<2x128xf32, #tpu.memory_space<vmem>>, vector<2x128xf32>
      %33 = vector.broadcast %30 : vector<1x128xf32> to vector<2x128xf32>
      %34 = arith.mulf %32, %33 : vector<2x128xf32>
      %35 = vector.broadcast %31 : vector<1x128xf32> to vector<2x128xf32>
      %36 = arith.addf %34, %35 : vector<2x128xf32>
      %37 = arith.mulf %36, %36 : vector<2x128xf32>
      %cst_23 = arith.constant dense<0.000000e+00> : vector<2xf32>
      %38 = vector.multi_reduction <add>, %37, %cst_23 [1] : vector<2x128xf32> to vector<2xf32>
      %39 = vector.shape_cast %38 : vector<2xf32> to vector<2x1xf32>
      %cst_24 = arith.constant 1.000000e-24 : f32
      %40 = vector.broadcast %cst_24 : f32 to vector<2x1xf32>
      %41 = arith.maximumf %39, %40 : vector<2x1xf32>
      %42 = math.rsqrt %41 : vector<2x1xf32>
      %43 = vector.broadcast %42 : vector<2x1xf32> to vector<2x128xf32>
      %44 = arith.mulf %36, %43 : vector<2x128xf32>
      %c0_25 = arith.constant 0 : index
      %c0_26 = arith.constant 0 : index
      %c0_27 = arith.constant 0 : index
      %45 = vector.load %arg6[%c0_25, %c0_26, %c0_27] : memref<1x2x128xf32, #tpu.memory_space<vmem>>, vector<1x2x128xf32>
      %46 = vector.shape_cast %45 : vector<1x2x128xf32> to vector<2x128xf32>
      %47 = vector.shape_cast %44 : vector<2x128xf32> to vector<1x2x128xf32>
      tpu.vector_store %arg6[%c0_25, %c0_26, %c0_27], %47 {strides = array<i32>} : memref<1x2x128xf32, #tpu.memory_space<vmem>>, vector<1x2x128xf32>,
    } else {
    }
    return
  }
  func.func @transform_0(%arg0: i32, %arg1: i32) -> (i32, i32, i32, i32) {
    %c0_i32 = arith.constant 0 : i32
    %c0_i32_0 = arith.constant 0 : i32
    %c0_i32_1 = arith.constant 0 : i32
    return %arg0, %c0_i32, %arg1, %c0_i32_0 : i32, i32, i32, i32
  }
  func.func @transform_1(%arg0: i32, %arg1: i32) -> (i32, i32) {
    %c0_i32 = arith.constant 0 : i32
    %c0_i32_0 = arith.constant 0 : i32
    %c0_i32_1 = arith.constant 0 : i32
    return %c0_i32, %c0_i32_0 : i32, i32
  }
  func.func @transform_2(%arg0: i32, %arg1: i32) -> (i32, i32) {
    %c0_i32 = arith.constant 0 : i32
    %c0_i32_0 = arith.constant 0 : i32
    %c0_i32_1 = arith.constant 0 : i32
    return %c0_i32, %c0_i32_0 : i32, i32
  }
  func.func @transform_3(%arg0: i32, %arg1: i32) -> (i32, i32) {
    %c0_i32 = arith.constant 0 : i32
    %c0_i32_0 = arith.constant 0 : i32
    %c0_i32_1 = arith.constant 0 : i32
    return %c0_i32, %c0_i32_0 : i32, i32
  }
  func.func @transform_4(%arg0: i32, %arg1: i32) -> (i32, i32, i32) {
    %c0_i32 = arith.constant 0 : i32
    %c0_i32_0 = arith.constant 0 : i32
    %c0_i32_1 = arith.constant 0 : i32
    return %arg0, %c0_i32, %c0_i32_0 : i32, i32, i32
  }
}

</mosaic_0001>

<llo_original>
// kernel: tpu_custom_call.1
$region0: #{tpu_custom_call.1}
  #allocation0 [shape = 'u32[]', space=smem, size = 0x4, offset = 0x4, fixed_abs, tag = 'smem constant byte address 0x4 - core index']
  #allocation1 [shape = 'u32[144,128]{1,0:T(1,128)}', space=vmem, size = 0x12000, scoped, tag = 'internal scratch']
  #allocation2 [shape = 'f32[2,128]{1,0:T(2,128)}', space=vmem, size = 0x400, scoped, tag = 'scratch operand']
  %s0 = inlined_call_operand.vmem [shape: bf16[2,8,16,4], index: 0, kind: input, shape index: {}]
  %s1 = inlined_call_operand.vmem [shape: bf16[4,128], index: 1, kind: input, shape index: {}]
  %s2 = inlined_call_operand.vmem [shape: bf16[128,128], index: 2, kind: input, shape index: {}]
  %s3 = inlined_call_operand.vmem [shape: f32[4,128], index: 3, kind: input, shape index: {}]
  %s4 = inlined_call_operand.hbm [shape: f32[1,2,128], index: 4, kind: output, shape index: {}]
  %s5 = sld [smem:[#allocation0]]
  $region34: #{tpu_custom_call.1} parent=0
    _
  %s7 = ssub.s32 1, %s5
  %s8 = scalar_select 0, %s7, %s5
  $region1: #{tpu_custom_call.1} parent=0
    #allocation3 [shape = 'u8[1024]{0}', space=vmem, size = 0x400, scoped, tag = 'output window, operand 0, single buffered']
    #allocation4 [shape = 's32[1]{0}', space=sflag, size = 0x4, scoped, tag = 'scoped memory for tpu_custom_call.1']
    %9 = vsyncpa [#allocation4], 0
    // Predicated region
    $region2: #{tpu_custom_call.1} parent=1 // pred_check
      _
    $region3: #{tpu_custom_call.1} parent=1 // pred_check_branch
      %11 = sbr.rel (0) target = $region5
    $region4: #{tpu_custom_call.1} parent=1 // pred_region
      _
    $region5: #{tpu_custom_call.1} parent=1 // pred_fallthru
      _
    // Predicated region
    $region6: #{tpu_custom_call.1} parent=1 // pred_check
      _
    $region7: #{tpu_custom_call.1} parent=1 // pred_check_branch
      %13 = sbr.rel (0) target = $region9
    $region8: #{tpu_custom_call.1} parent=1 // pred_region
      _
    $region9: #{tpu_custom_call.1} parent=1 // pred_fallthru
      _
    // Predicated region
    $region10: #{tpu_custom_call.1} parent=1 // pred_check
      _
    $region11: #{tpu_custom_call.1} parent=1 // pred_check_branch
      %15 = sbr.rel (0) target = $region13
    $region12: #{tpu_custom_call.1} parent=1 // pred_region
      _
    $region13: #{tpu_custom_call.1} parent=1 // pred_fallthru
      _
    // Predicated region
    $region14: #{tpu_custom_call.1} parent=1 // pred_check
      _
    $region15: #{tpu_custom_call.1} parent=1 // pred_check_branch
      %17 = sbr.rel (0) target = $region17
    $region16: #{tpu_custom_call.1} parent=1 // pred_region
      _
    $region17: #{tpu_custom_call.1} parent=1 // pred_fallthru
      _
    %p19 = scmp.eq.s32.totalorder 0, 0
    // Predicated region
    $region18: #{tpu_custom_call.1} parent=1 // pred_check
      %p20 = pneg %p19
    $region19: #{tpu_custom_call.1} parent=1 // pred_check_branch
      %22 = sbr.rel (%p20) target = $region21
    $region20: #{tpu_custom_call.1} parent=1 // pred_region
      %23 = vst [vmem:[#allocation2] sm:$0x3] -inf
    $region21: #{tpu_custom_call.1} parent=1 // pred_fallthru
      _
    %v24 = vld [vmem:[%s3] sm:$0xf]
    %v25 = vld [vmem:[%s0] sm:$0xf]
    %v26 = vld [vmem:[%s0 + $0x4] sm:$0xf]
    %v27 = vld [vmem:[%s0 + $0x8] sm:$0xf]
    %v28 = vld [vmem:[%s0 + $0xc] sm:$0xf]
    %v29 = vld [vmem:[%s0 + $0x10] sm:$0xf]
    %v30 = vld [vmem:[%s0 + $0x14] sm:$0xf]
    %v31 = vld [vmem:[%s0 + $0x18] sm:$0xf]
    %v32 = vld [vmem:[%s0 + $0x1c] sm:$0xf]
    %v33 = vld [vmem:[%s0 + $0x20] sm:$0xf]
    %v34 = vld [vmem:[%s0 + $0x24] sm:$0xf]
    %v35 = vld [vmem:[%s0 + $0x28] sm:$0xf]
    %v36 = vld [vmem:[%s0 + $0x2c] sm:$0xf]
    %v37 = vld [vmem:[%s0 + $0x30] sm:$0xf]
    %v38 = vld [vmem:[%s0 + $0x34] sm:$0xf]
    %v39 = vld [vmem:[%s0 + $0x38] sm:$0xf]
    %v40 = vld [vmem:[%s0 + $0x3c] sm:$0xf]
    %v41 = vld [vmem:[%s0 + $0x40] sm:$0xf]
    %v42 = vld [vmem:[%s0 + $0x44] sm:$0xf]
    %v43 = vld [vmem:[%s0 + $0x48] sm:$0xf]
    %v44 = vld [vmem:[%s0 + $0x4c] sm:$0xf]
    %v45 = vld [vmem:[%s0 + $0x50] sm:$0xf]
    %v46 = vld [vmem:[%s0 + $0x54] sm:$0xf]
    %v47 = vld [vmem:[%s0 + $0x58] sm:$0xf]
    %v48 = vld [vmem:[%s0 + $0x5c] sm:$0xf]
    %v49 = vld [vmem:[%s0 + $0x60] sm:$0xf]
    %v50 = vld [vmem:[%s0 + $0x64] sm:$0xf]
    %v51 = vld [vmem:[%s0 + $0x68] sm:$0xf]
    %v52 = vld [vmem:[%s0 + $0x6c] sm:$0xf]
    %v53 = vld [vmem:[%s0 + $0x70] sm:$0xf]
    %v54 = vld [vmem:[%s0 + $0x74] sm:$0xf]
    %v55 = vld [vmem:[%s0 + $0x78] sm:$0xf]
    %v56 = vld [vmem:[%s0 + $0x7c] sm:$0xf]
    %v57 = vld [vmem:[%s1] sm:$0x3]
    %v58 = vlaneseq
    %v59 = vshrl.u32 %v58, 7
    %v60 = vsub.s32 0, %v59
    %v61 = vrot.slane %v24, %v60
    %v94 = vunpack.c.l.b16 %v25
    %v95 = vunpack.c.l.b16 %v26
    %v96 = vunpack.c.l.b16 %v27
    %v97 = vunpack.c.l.b16 %v28
    %v98 = vunpack.c.l.b16 %v29
    %v99 = vunpack.c.l.b16 %v30
    %v100 = vunpack.c.l.b16 %v31
    %v101 = vunpack.c.l.b16 %v32
    %v102 = vunpack.c.l.b16 %v33
    %v103 = vunpack.c.l.b16 %v34
    %v104 = vunpack.c.l.b16 %v35
    %v105 = vunpack.c.l.b16 %v36
    %v106 = vunpack.c.l.b16 %v37
    %v107 = vunpack.c.l.b16 %v38
    %v108 = vunpack.c.l.b16 %v39
    %v109 = vunpack.c.l.b16 %v40
    %v110 = vunpack.c.l.b16 %v41
    %v111 = vunpack.c.l.b16 %v42
    %v112 = vunpack.c.l.b16 %v43
    %v113 = vunpack.c.l.b16 %v44
    %v114 = vunpack.c.l.b16 %v45
    %v115 = vunpack.c.l.b16 %v46
    %v116 = vunpack.c.l.b16 %v47
    %v117 = vunpack.c.l.b16 %v48
    %v118 = vunpack.c.l.b16 %v49
    %v119 = vunpack.c.l.b16 %v50
    %v120 = vunpack.c.l.b16 %v51
    %v121 = vunpack.c.l.b16 %v52
    %v122 = vunpack.c.l.b16 %v53
    %v123 = vunpack.c.l.b16 %v54
    %v124 = vunpack.c.l.b16 %v55
    %v125 = vunpack.c.l.b16 %v56
    %v126 = vpack.c.b16 %v95, %v94
    %v127 = vpack.c.b16 %v97, %v96
    %v128 = vpack.c.b16 %v99, %v98
    %v129 = vpack.c.b16 %v101, %v100
    %v130 = vpack.c.b16 %v103, %v102
    %v131 = vpack.c.b16 %v105, %v104
    %v132 = vpack.c.b16 %v107, %v106
    %v133 = vpack.c.b16 %v109, %v108
    %v134 = vpack.c.b16 %v111, %v110
    %v135 = vpack.c.b16 %v113, %v112
    %v136 = vpack.c.b16 %v115, %v114
    %v137 = vpack.c.b16 %v117, %v116
    %v138 = vpack.c.b16 %v119, %v118
    %v139 = vpack.c.b16 %v121, %v120
    %v140 = vpack.c.b16 %v123, %v122
    %v141 = vpack.c.b16 %v125, %v124
    %vm142 = vcmask 31744
    %v144 = vsel %vm142, %v126, 0
    %v147 = vsel %vm142, %v127, 0
    %v150 = vsel %vm142, %v128, 0
    %v153 = vsel %vm142, %v129, 0
    %v156 = vsel %vm142, %v130, 0
    %v159 = vsel %vm142, %v131, 0
    %v162 = vsel %vm142, %v132, 0
    %v165 = vsel %vm142, %v133, 0
    %v168 = vsel %vm142, %v134, 0
    %v171 = vsel %vm142, %v135, 0
    %v174 = vsel %vm142, %v136, 0
    %v177 = vsel %vm142, %v137, 0
    %v180 = vsel %vm142, %v138, 0
    %v183 = vsel %vm142, %v139, 0
    %v186 = vsel %vm142, %v140, 0
    %v189 = vsel %vm142, %v141, 0
    %vm191 = vcmask 1041408
    %v193 = vsel %vm191, %v57, 0
    %195 = vmatprep.subr.bf16.mxu0 0
    %196 = vmatpush1.bf16.msra.mxu0 %v193
    %197 = vmatprep.subr.bf16.mxu0 0
    %198 = vmatpush1.bf16.msra.mxu0 0
    %199 = vmatprep.subr.bf16.mxu0 0
    %200 = vmatpush1.bf16.msra.mxu0 0
    %201 = vmatprep.subr.bf16.mxu0 0
    %202 = vmatpush1.bf16.msra.mxu0 0
    %203 = vmatprep.subr.bf16.mxu0 0
    %204 = vmatpush1.bf16.msra.mxu0 0
    %205 = vmatprep.subr.bf16.mxu0 0
    %206 = vmatpush1.bf16.msra.mxu0 0
    %207 = vmatprep.subr.bf16.mxu0 0
    %208 = vmatpush1.bf16.msra.mxu0 0
    %209 = vmatprep.subr.bf16.mxu0 0
    %210 = vmatpush1.bf16.msra.mxu0 0
    %211 = vmatprep.subr.bf16.mxu0 0
    %212 = vmatpush1.bf16.msra.mxu0 0
    %213 = vmatprep.subr.bf16.mxu0 0
    %214 = vmatpush1.bf16.msra.mxu0 0
    %215 = vmatprep.subr.bf16.mxu0 0
    %216 = vmatpush1.bf16.msra.mxu0 0
    %217 = vmatprep.subr.bf16.mxu0 0
    %218 = vmatpush1.bf16.msra.mxu0 0
    %219 = vmatprep.subr.bf16.mxu0 0
    %220 = vmatpush1.bf16.msra.mxu0 0
    %221 = vmatprep.subr.bf16.mxu0 0
    %222 = vmatpush1.bf16.msra.mxu0 0
    %223 = vmatprep.subr.bf16.mxu0 0
    %224 = vmatpush1.bf16.msra.mxu0 0
    %225 = vmatprep.subr.bf16.mxu0 0
    %226 = vmatpush1.bf16.msra.mxu0 0
    %227 = vmatprep.mubr.bf16.mxu0 0
    %228 = vmatmul.mubr.bf16.gmra.mrb[0].mxu0 %v144
    %v229 = vpop.f32.mrb[0].mxu0
    %v230 = vadd.f32 %v61, %v229
    %v231 = vpop.f32.mrb[0].mxu0
    %v232 = vpop.f32.mrb[0].mxu0
    %v233 = vadd.f32 %v61, %v232
    %v234 = vpop.f32.mrb[0].mxu0
    %235 = vmatprep.mubr.bf16.mxu0 0
    %236 = vmatmul.mubr.bf16.gmra.mrb[0].mxu0 %v147
    %v237 = vpop.f32.mrb[0].mxu0
    %v238 = vadd.f32 %v61, %v237
    %v239 = vpop.f32.mrb[0].mxu0
    %v240 = vpop.f32.mrb[0].mxu0
    %v241 = vadd.f32 %v61, %v240
    %v242 = vpop.f32.mrb[0].mxu0
    %243 = vmatprep.mubr.bf16.mxu0 0
    %244 = vmatmul.mubr.bf16.gmra.mrb[0].mxu0 %v150
    %v245 = vpop.f32.mrb[0].mxu0
    %v246 = vadd.f32 %v61, %v245
    %v247 = vpop.f32.mrb[0].mxu0
    %v248 = vpop.f32.mrb[0].mxu0
    %v249 = vadd.f32 %v61, %v248
    %v250 = vpop.f32.mrb[0].mxu0
    %251 = vmatprep.mubr.bf16.mxu0 0
    %252 = vmatmul.mubr.bf16.gmra.mrb[0].mxu0 %v153
    %v253 = vpop.f32.mrb[0].mxu0
    %v254 = vadd.f32 %v61, %v253
    %v255 = vpop.f32.mrb[0].mxu0
    %v256 = vpop.f32.mrb[0].mxu0
    %v257 = vadd.f32 %v61, %v256
    %v258 = vpop.f32.mrb[0].mxu0
    %259 = vmatprep.mubr.bf16.mxu0 0
    %260 = vmatmul.mubr.bf16.gmra.mrb[0].mxu0 %v156
    %v261 = vpop.f32.mrb[0].mxu0
    %v262 = vadd.f32 %v61, %v261
    %v263 = vpop.f32.mrb[0].mxu0
    %v264 = vpop.f32.mrb[0].mxu0
    %v265 = vadd.f32 %v61, %v264
    %v266 = vpop.f32.mrb[0].mxu0
    %267 = vmatprep.mubr.bf16.mxu0 0
    %268 = vmatmul.mubr.bf16.gmra.mrb[0].mxu0 %v159
    %v269 = vpop.f32.mrb[0].mxu0
    %v270 = vadd.f32 %v61, %v269
    %v271 = vpop.f32.mrb[0].mxu0
    %v272 = vpop.f32.mrb[0].mxu0
    %v273 = vadd.f32 %v61, %v272
    %v274 = vpop.f32.mrb[0].mxu0
    %275 = vmatprep.mubr.bf16.mxu0 0
    %276 = vmatmul.mubr.bf16.gmra.mrb[0].mxu0 %v162
    %v277 = vpop.f32.mrb[0].mxu0
    %v278 = vadd.f32 %v61, %v277
    %v279 = vpop.f32.mrb[0].mxu0
    %v280 = vpop.f32.mrb[0].mxu0
    %v281 = vadd.f32 %v61, %v280
    %v282 = vpop.f32.mrb[0].mxu0
    %283 = vmatprep.mubr.bf16.mxu0 0
    %284 = vmatmul.mubr.bf16.gmra.mrb[0].mxu0 %v165
    %v285 = vpop.f32.mrb[0].mxu0
    %v286 = vadd.f32 %v61, %v285
    %v287 = vpop.f32.mrb[0].mxu0
    %v288 = vpop.f32.mrb[0].mxu0
    %v289 = vadd.f32 %v61, %v288
    %v290 = vpop.f32.mrb[0].mxu0
    %291 = vmatprep.mubr.bf16.mxu0 0
    %292 = vmatmul.mubr.bf16.gmra.mrb[0].mxu0 %v168
    %v293 = vpop.f32.mrb[0].mxu0
    %v294 = vadd.f32 %v61, %v293
    %v295 = vpop.f32.mrb[0].mxu0
    %v296 = vpop.f32.mrb[0].mxu0
    %v297 = vadd.f32 %v61, %v296
    %v298 = vpop.f32.mrb[0].mxu0
    %299 = vmatprep.mubr.bf16.mxu0 0
    %300 = vmatmul.mubr.bf16.gmra.mrb[0].mxu0 %v171
    %v301 = vpop.f32.mrb[0].mxu0
    %v302 = vadd.f32 %v61, %v301
    %v303 = vpop.f32.mrb[0].mxu0
    %v304 = vpop.f32.mrb[0].mxu0
    %v305 = vadd.f32 %v61, %v304
    %v306 = vpop.f32.mrb[0].mxu0
    %307 = vmatprep.mubr.bf16.mxu0 0
    %308 = vmatmul.mubr.bf16.gmra.mrb[0].mxu0 %v174
    %v309 = vpop.f32.mrb[0].mxu0
    %v310 = vadd.f32 %v61, %v309
    %v311 = vpop.f32.mrb[0].mxu0
    %v312 = vpop.f32.mrb[0].mxu0
    %v313 = vadd.f32 %v61, %v312
    %v314 = vpop.f32.mrb[0].mxu0
    %315 = vmatprep.mubr.bf16.mxu0 0
    %316 = vmatmul.mubr.bf16.gmra.mrb[0].mxu0 %v177
    %v317 = vpop.f32.mrb[0].mxu0
    %v318 = vadd.f32 %v61, %v317
    %v319 = vpop.f32.mrb[0].mxu0
    %v320 = vpop.f32.mrb[0].mxu0
    %v321 = vadd.f32 %v61, %v320
    %v322 = vpop.f32.mrb[0].mxu0
    %323 = vmatprep.mubr.bf16.mxu0 0
    %324 = vmatmul.mubr.bf16.gmra.mrb[0].mxu0 %v180
    %v325 = vpop.f32.mrb[0].mxu0
    %v326 = vadd.f32 %v61, %v325
    %v327 = vpop.f32.mrb[0].mxu0
    %v328 = vpop.f32.mrb[0].mxu0
    %v329 = vadd.f32 %v61, %v328
    %v330 = vpop.f32.mrb[0].mxu0
    %331 = vmatprep.mubr.bf16.mxu0 0
    %332 = vmatmul.mubr.bf16.gmra.mrb[0].mxu0 %v183
    %v333 = vpop.f32.mrb[0].mxu0
    %v334 = vadd.f32 %v61, %v333
    %v335 = vpop.f32.mrb[0].mxu0
    %v336 = vpop.f32.mrb[0].mxu0
    %v337 = vadd.f32 %v61, %v336
    %v338 = vpop.f32.mrb[0].mxu0
    %339 = vmatprep.mubr.bf16.mxu0 0
    %340 = vmatmul.mubr.bf16.gmra.mrb[0].mxu0 %v186
    %v341 = vpop.f32.mrb[0].mxu0
    %v342 = vadd.f32 %v61, %v341
    %v343 = vpop.f32.mrb[0].mxu0
    %v344 = vpop.f32.mrb[0].mxu0
    %v345 = vadd.f32 %v61, %v344
    %v346 = vpop.f32.mrb[0].mxu0
    %347 = vmatprep.mubr.bf16.mxu0 0
    %348 = vmatmul.mubr.bf16.gmra.mrb[0].mxu0 %v189
    %v349 = vpop.f32.mrb[0].mxu0
    %v350 = vadd.f32 %v61, %v349
    %v351 = vpop.f32.mrb[0].mxu0
    %v352 = vpop.f32.mrb[0].mxu0
    %v353 = vadd.f32 %v61, %v352
    %v354 = vpop.f32.mrb[0].mxu0
    %355 = vdwg.mxu0
    %v356 = vmax.f32 %v230, 0.0
    %v357 = vmax.f32 %v233, 0.0
    %v358 = vmax.f32 %v238, 0.0
    %v359 = vmax.f32 %v241, 0.0
    %v360 = vmax.f32 %v246, 0.0
    %v361 = vmax.f32 %v249, 0.0
    %v362 = vmax.f32 %v254, 0.0
    %v363 = vmax.f32 %v257, 0.0
    %v364 = vmax.f32 %v262, 0.0
    %v365 = vmax.f32 %v265, 0.0
    %v366 = vmax.f32 %v270, 0.0
    %v367 = vmax.f32 %v273, 0.0
    %v368 = vmax.f32 %v278, 0.0
    %v369 = vmax.f32 %v281, 0.0
    %v370 = vmax.f32 %v286, 0.0
    %v371 = vmax.f32 %v289, 0.0
    %v372 = vmax.f32 %v294, 0.0
    %v373 = vmax.f32 %v297, 0.0
    %v374 = vmax.f32 %v302, 0.0
    %v375 = vmax.f32 %v305, 0.0
    %v376 = vmax.f32 %v310, 0.0
    %v377 = vmax.f32 %v313, 0.0
    %v378 = vmax.f32 %v318, 0.0
    %v379 = vmax.f32 %v321, 0.0
    %v380 = vmax.f32 %v326, 0.0
    %v381 = vmax.f32 %v329, 0.0
    %v382 = vmax.f32 %v334, 0.0
    %v383 = vmax.f32 %v337, 0.0
    %v384 = vmax.f32 %v342, 0.0
    %v385 = vmax.f32 %v345, 0.0
    %v386 = vmax.f32 %v350, 0.0
    %v387 = vmax.f32 %v353, 0.0
    %v388 = vld [vmem:[%s2] sm:$0xf]
    %v389 = vld [vmem:[%s2 + $0x4] sm:$0xf]
    %v390 = vld [vmem:[%s2 + $0x8] sm:$0xf]
    %v391 = vld [vmem:[%s2 + $0xc] sm:$0xf]
    %v392 = vld [vmem:[%s2 + $0x10] sm:$0xf]
    %v393 = vld [vmem:[%s2 + $0x14] sm:$0xf]
    %v394 = vld [vmem:[%s2 + $0x18] sm:$0xf]
    %v395 = vld [vmem:[%s2 + $0x1c] sm:$0xf]
    %v396 = vld [vmem:[%s2 + $0x20] sm:$0xf]
    %v397 = vld [vmem:[%s2 + $0x24] sm:$0xf]
    %v398 = vld [vmem:[%s2 + $0x28] sm:$0xf]
    %v399 = vld [vmem:[%s2 + $0x2c] sm:$0xf]
    %v400 = vld [vmem:[%s2 + $0x30] sm:$0xf]
    %v401 = vld [vmem:[%s2 + $0x34] sm:$0xf]
    %v402 = vld [vmem:[%s2 + $0x38] sm:$0xf]
    %v403 = vld [vmem:[%s2 + $0x3c] sm:$0xf]
    %v404 = vpack.c.bf16 %v357, %v356
    %v405 = vpack.c.bf16 %v359, %v358
    %v406 = vpack.c.bf16 %v361, %v360
    %v407 = vpack.c.bf16 %v363, %v362
    %v408 = vpack.c.bf16 %v365, %v364
    %v409 = vpack.c.bf16 %v367, %v366
    %v410 = vpack.c.bf16 %v369, %v368
    %v411 = vpack.c.bf16 %v371, %v370
    %v412 = vpack.c.bf16 %v373, %v372
    %v413 = vpack.c.bf16 %v375, %v374
    %v414 = vpack.c.bf16 %v377, %v376
    %v415 = vpack.c.bf16 %v379, %v378
    %v416 = vpack.c.bf16 %v381, %v380
    %v417 = vpack.c.bf16 %v383, %v382
    %v418 = vpack.c.bf16 %v385, %v384
    %v419 = vpack.c.bf16 %v387, %v386
    %v420 = vlaneseq
    %v421 = vshrl.u32 %v420, 7
    %v422 = vsub.s32 1, %v421
    %v423 = vrot.slane %v24, %v422
    %v440 = vunpack.c.l.b16 %v388
    %v441 = vunpack.c.l.b16 %v389
    %v442 = vunpack.c.l.b16 %v390
    %v443 = vunpack.c.l.b16 %v391
    %v444 = vunpack.c.l.b16 %v392
    %v445 = vunpack.c.l.b16 %v393
    %v446 = vunpack.c.l.b16 %v394
    %v447 = vunpack.c.l.b16 %v395
    %v448 = vunpack.c.l.b16 %v396
    %v449 = vunpack.c.l.b16 %v397
    %v450 = vunpack.c.l.b16 %v398
    %v451 = vunpack.c.l.b16 %v399
    %v452 = vunpack.c.l.b16 %v400
    %v453 = vunpack.c.l.b16 %v401
    %v454 = vunpack.c.l.b16 %v402
    %v455 = vunpack.c.l.b16 %v403
    %v456 = vpack.c.b16 %v441, %v440
    %v457 = vpack.c.b16 %v443, %v442
    %v458 = vpack.c.b16 %v445, %v444
    %v459 = vpack.c.b16 %v447, %v446
    %v460 = vpack.c.b16 %v449, %v448
    %v461 = vpack.c.b16 %v451, %v450
    %v462 = vpack.c.b16 %v453, %v452
    %v463 = vpack.c.b16 %v455, %v454
    %472 = vmatprep.subr.bf16.mxu0 0
    %473 = vmatpush1.bf16.msra.mxu0 %v456
    %474 = vmatprep.subr.bf16.mxu0 0
    %475 = vmatpush1.bf16.msra.mxu0 %v457
    %476 = vmatprep.subr.bf16.mxu0 0
    %477 = vmatpush1.bf16.msra.mxu0 %v458
    %478 = vmatprep.subr.bf16.mxu0 0
    %479 = vmatpush1.bf16.msra.mxu0 %v459
    %480 = vmatprep.subr.bf16.mxu0 0
    %481 = vmatpush1.bf16.msra.mxu0 %v460
    %482 = vmatprep.subr.bf16.mxu0 0
    %483 = vmatpush1.bf16.msra.mxu0 %v461
    %484 = vmatprep.subr.bf16.mxu0 0
    %485 = vmatpush1.bf16.msra.mxu0 %v462
    %486 = vmatprep.subr.bf16.mxu0 0
    %487 = vmatpush1.bf16.msra.mxu0 %v463
    %488 = vmatprep.subr.bf16.mxu0 0
    %489 = vmatpush1.bf16.msra.mxu0 0
    %490 = vmatprep.subr.bf16.mxu0 0
    %491 = vmatpush1.bf16.msra.mxu0 0
    %492 = vmatprep.subr.bf16.mxu0 0
    %493 = vmatpush1.bf16.msra.mxu0 0
    %494 = vmatprep.subr.bf16.mxu0 0
    %495 = vmatpush1.bf16.msra.mxu0 0
    %496 = vmatprep.subr.bf16.mxu0 0
    %497 = vmatpush1.bf16.msra.mxu0 0
    %498 = vmatprep.subr.bf16.mxu0 0
    %499 = vmatpush1.bf16.msra.mxu0 0
    %500 = vmatprep.subr.bf16.mxu0 0
    %501 = vmatpush1.bf16.msra.mxu0 0
    %502 = vmatprep.subr.bf16.mxu0 0
    %503 = vmatpush1.bf16.msra.mxu0 0
    %504 = vmatprep.mubr.bf16.mxu0 0
    %505 = vmatmul.mubr.bf16.gmra.mrb[0].mxu0 %v404
    %v506 = vpop.f32.mrb[0].mxu0
    %v507 = vadd.f32 %v423, %v506
    %v508 = vpop.f32.mrb[0].mxu0
    %v509 = vpop.f32.mrb[0].mxu0
    %v510 = vadd.f32 %v423, %v509
    %v511 = vpop.f32.mrb[0].mxu0
    %512 = vmatprep.mubr.bf16.mxu0 0
    %513 = vmatmul.mubr.bf16.gmra.mrb[0].mxu0 %v405
    %v514 = vpop.f32.mrb[0].mxu0
    %v515 = vadd.f32 %v423, %v514
    %v516 = vpop.f32.mrb[0].mxu0
    %v517 = vpop.f32.mrb[0].mxu0
    %v518 = vadd.f32 %v423, %v517
    %v519 = vpop.f32.mrb[0].mxu0
    %520 = vmatprep.mubr.bf16.mxu0 0
    %521 = vmatmul.mubr.bf16.gmra.mrb[0].mxu0 %v406
    %v522 = vpop.f32.mrb[0].mxu0
    %v523 = vadd.f32 %v423, %v522
    %v524 = vpop.f32.mrb[0].mxu0
    %v525 = vpop.f32.mrb[0].mxu0
    %v526 = vadd.f32 %v423, %v525
    %v527 = vpop.f32.mrb[0].mxu0
    %528 = vmatprep.mubr.bf16.mxu0 0
    %529 = vmatmul.mubr.bf16.gmra.mrb[0].mxu0 %v407
    %v530 = vpop.f32.mrb[0].mxu0
    %v531 = vadd.f32 %v423, %v530
    %v532 = vpop.f32.mrb[0].mxu0
    %v533 = vpop.f32.mrb[0].mxu0
    %v534 = vadd.f32 %v423, %v533
    %v535 = vpop.f32.mrb[0].mxu0
    %536 = vmatprep.mubr.bf16.mxu0 0
    %537 = vmatmul.mubr.bf16.gmra.mrb[0].mxu0 %v408
    %v538 = vpop.f32.mrb[0].mxu0
    %v539 = vadd.f32 %v423, %v538
    %v540 = vpop.f32.mrb[0].mxu0
    %v541 = vpop.f32.mrb[0].mxu0
    %v542 = vadd.f32 %v423, %v541
    %v543 = vpop.f32.mrb[0].mxu0
    %544 = vmatprep.mubr.bf16.mxu0 0
    %545 = vmatmul.mubr.bf16.gmra.mrb[0].mxu0 %v409
    %v546 = vpop.f32.mrb[0].mxu0
    %v547 = vadd.f32 %v423, %v546
    %v548 = vpop.f32.mrb[0].mxu0
    %v549 = vpop.f32.mrb[0].mxu0
    %v550 = vadd.f32 %v423, %v549
    %v551 = vpop.f32.mrb[0].mxu0
    %552 = vmatprep.mubr.bf16.mxu0 0
    %553 = vmatmul.mubr.bf16.gmra.mrb[0].mxu0 %v410
    %v554 = vpop.f32.mrb[0].mxu0
    %v555 = vadd.f32 %v423, %v554
    %v556 = vpop.f32.mrb[0].mxu0
    %v557 = vpop.f32.mrb[0].mxu0
    %v558 = vadd.f32 %v423, %v557
    %v559 = vpop.f32.mrb[0].mxu0
    %560 = vmatprep.mubr.bf16.mxu0 0
    %561 = vmatmul.mubr.bf16.gmra.mrb[0].mxu0 %v411
    %v562 = vpop.f32.mrb[0].mxu0
    %v563 = vadd.f32 %v423, %v562
    %v564 = vpop.f32.mrb[0].mxu0
    %v565 = vpop.f32.mrb[0].mxu0
    %v566 = vadd.f32 %v423, %v565
    %v567 = vpop.f32.mrb[0].mxu0
    %568 = vmatprep.mubr.bf16.mxu0 0
    %569 = vmatmul.mubr.bf16.gmra.mrb[0].mxu0 %v412
    %v570 = vpop.f32.mrb[0].mxu0
    %v571 = vadd.f32 %v423, %v570
    %v572 = vpop.f32.mrb[0].mxu0
    %v573 = vpop.f32.mrb[0].mxu0
    %v574 = vadd.f32 %v423, %v573
    %v575 = vpop.f32.mrb[0].mxu0
    %576 = vmatprep.mubr.bf16.mxu0 0
    %577 = vmatmul.mubr.bf16.gmra.mrb[0].mxu0 %v413
    %v578 = vpop.f32.mrb[0].mxu0
    %v579 = vadd.f32 %v423, %v578
    %v580 = vpop.f32.mrb[0].mxu0
    %v581 = vpop.f32.mrb[0].mxu0
    %v582 = vadd.f32 %v423, %v581
    %v583 = vpop.f32.mrb[0].mxu0
    %584 = vmatprep.mubr.bf16.mxu0 0
    %585 = vmatmul.mubr.bf16.gmra.mrb[0].mxu0 %v414
    %v586 = vpop.f32.mrb[0].mxu0
    %v587 = vadd.f32 %v423, %v586
    %v588 = vpop.f32.mrb[0].mxu0
    %v589 = vpop.f32.mrb[0].mxu0
    %v590 = vadd.f32 %v423, %v589
    %v591 = vpop.f32.mrb[0].mxu0
    %592 = vmatprep.mubr.bf16.mxu0 0
    %593 = vmatmul.mubr.bf16.gmra.mrb[0].mxu0 %v415
    %v594 = vpop.f32.mrb[0].mxu0
    %v595 = vadd.f32 %v423, %v594
    %v596 = vpop.f32.mrb[0].mxu0
    %v597 = vpop.f32.mrb[0].mxu0
    %v598 = vadd.f32 %v423, %v597
    %v599 = vpop.f32.mrb[0].mxu0
    %600 = vmatprep.mubr.bf16.mxu0 0
    %601 = vmatmul.mubr.bf16.gmra.mrb[0].mxu0 %v416
    %v602 = vpop.f32.mrb[0].mxu0
    %v603 = vadd.f32 %v423, %v602
    %v604 = vpop.f32.mrb[0].mxu0
    %v605 = vpop.f32.mrb[0].mxu0
    %v606 = vadd.f32 %v423, %v605
    %v607 = vpop.f32.mrb[0].mxu0
    %608 = vmatprep.mubr.bf16.mxu0 0
    %609 = vmatmul.mubr.bf16.gmra.mrb[0].mxu0 %v417
    %v610 = vpop.f32.mrb[0].mxu0
    %v611 = vadd.f32 %v423, %v610
    %v612 = vpop.f32.mrb[0].mxu0
    %v613 = vpop.f32.mrb[0].mxu0
    %v614 = vadd.f32 %v423, %v613
    %v615 = vpop.f32.mrb[0].mxu0
    %616 = vmatprep.mubr.bf16.mxu0 0
    %617 = vmatmul.mubr.bf16.gmra.mrb[0].mxu0 %v418
    %v618 = vpop.f32.mrb[0].mxu0
    %v619 = vadd.f32 %v423, %v618
    %v620 = vpop.f32.mrb[0].mxu0
    %v621 = vpop.f32.mrb[0].mxu0
    %v622 = vadd.f32 %v423, %v621
    %v623 = vpop.f32.mrb[0].mxu0
    %624 = vmatprep.mubr.bf16.mxu0 0
    %625 = vmatmul.mubr.bf16.gmra.mrb[0].mxu0 %v419
    %v626 = vpop.f32.mrb[0].mxu0
    %v627 = vadd.f32 %v423, %v626
    %v628 = vpop.f32.mrb[0].mxu0
    %v629 = vpop.f32.mrb[0].mxu0
    %v630 = vadd.f32 %v423, %v629
    %v631 = vpop.f32.mrb[0].mxu0
    %632 = vdwg.mxu0
    %v633 = vadd.f32 %v507, %v515
    %v634 = vadd.f32 %v633, %v523
    %v635 = vadd.f32 %v634, %v531
    %v636 = vadd.f32 %v635, %v539
    %v637 = vadd.f32 %v636, %v547
    %v638 = vadd.f32 %v637, %v555
    %v639 = vadd.f32 %v638, %v563
    %v640 = vadd.f32 %v510, %v518
    %v641 = vadd.f32 %v640, %v526
    %v642 = vadd.f32 %v641, %v534
    %v643 = vadd.f32 %v642, %v542
    %v644 = vadd.f32 %v643, %v550
    %v645 = vadd.f32 %v644, %v558
    %v646 = vadd.f32 %v645, %v566
    %v647 = vadd.f32 %v571, %v579
    %v648 = vadd.f32 %v647, %v587
    %v649 = vadd.f32 %v648, %v595
    %v650 = vadd.f32 %v649, %v603
    %v651 = vadd.f32 %v650, %v611
    %v652 = vadd.f32 %v651, %v619
    %v653 = vadd.f32 %v652, %v627
    %v654 = vadd.f32 %v574, %v582
    %v655 = vadd.f32 %v654, %v590
    %v656 = vadd.f32 %v655, %v598
    %v657 = vadd.f32 %v656, %v606
    %v658 = vadd.f32 %v657, %v614
    %v659 = vadd.f32 %v658, %v622
    %v660 = vadd.f32 %v659, %v630
    %v661 = vmul.f32 %v639, 0.125
    %v662 = vmul.f32 %v646, 0.125
    %v663 = vmul.f32 %v653, 0.125
    %v664 = vmul.f32 %v660, 0.125
    %v665 = vmax.f32 %v661, %v662
    %v666 = vrot.slane %v665, 4
    %v667 = vmax.f32 %v665, %v666
    %v668 = vrot.slane %v667, 2
    %v669 = vmax.f32 %v667, %v668
    %v670 = vrot.slane %v669, 1
    %v671 = vmax.f32 %v669, %v670
    %v672 = vmax.f32 %v663, %v664
    %v673 = vrot.slane %v672, 4
    %v674 = vmax.f32 %v672, %v673
    %v675 = vrot.slane %v674, 2
    %v676 = vmax.f32 %v674, %v675
    %v677 = vrot.slane %v676, 1
    %v678 = vmax.f32 %v676, %v677
    %v679 = vld [vmem:[#allocation2] sm:$0x3]
    %vm682 = vcmask 1041409
    %v683 = vsel %vm682, %v678, %v671
    %v685 = vmax.f32 %v679, %v683
    %686 = vst [vmem:[#allocation2] sm:$0x3] %v685
    // Predicated region
    $region22: #{tpu_custom_call.1} parent=1 // pred_check
      %p687 = pneg %p19
    $region23: #{tpu_custom_call.1} parent=1 // pred_check_branch
      %689 = sbr.rel (%p687) target = $region25
    $region24: #{tpu_custom_call.1} parent=1 // pred_region
      %v690 = vld [vmem:[#allocation2] sm:$0x3]
      %v691 = vlaneseq
      %v692 = vshrl.u32 %v691, 7
      %v693 = vsub.s32 2, %v692
      %v694 = vrot.slane %v24, %v693
      %v695 = vmul.f32 %v690, %v694
      %v696 = vlaneseq
      %v697 = vshrl.u32 %v696, 7
      %v698 = vsub.s32 3, %v697
      %v699 = vrot.slane %v24, %v698
      %v700 = vadd.f32 %v695, %v699
      %v701 = vmul.f32 %v700, %v700
      %v702 = vsel %vm191, %v701, 0.0
      %703 = vadd.xlane.f32.xlu0 %v702
      %v704 = vpop.xlane.xlu0 %703
      %v705 = vmax.f32 %v704, 1e-24
      %v706 = vrsqrt.pop %v705
      %v707 = vmul.f32 %v700, %v706
      %708 = vst [vmem:[#allocation3] sm:$0x3] %v707
    $region25: #{tpu_custom_call.1} parent=1 // pred_fallthru
      _
    // Predicated region
    $region26: #{tpu_custom_call.1} parent=1 // pred_check
      _
    $region27: #{tpu_custom_call.1} parent=1 // pred_check_branch
      %710 = sbr.rel (0) target = $region29
    $region28: #{tpu_custom_call.1} parent=1 // pred_region
      %s712 = ssub.s32 32, 32
      %713 = vsyncadd [#allocation4], %s712
      %s715 = sshll.u32 [#allocation3], 4
      %s716 = int_to_ptr.vmem [resolvable:$true] %s715
      %718 = dma.vmem_to_hbm [thread:$0]  %s716, 32, %s4, [#allocation4]
    $region29: #{tpu_custom_call.1} parent=1 // pred_fallthru
      _
    // Predicated region
    $region30: #{tpu_custom_call.1} parent=1 // pred_check
      _
    $region31: #{tpu_custom_call.1} parent=1 // pred_check_branch
      %720 = sbr.rel (0) target = $region33
    $region32: #{tpu_custom_call.1} parent=1 // pred_region
      %721 = dma.done [#allocation4], 32
    $region33: #{tpu_custom_call.1} parent=1 // pred_fallthru
      _
    %722 = vsyncpa [#allocation4], 1

</llo_original>
